<compile_context>
chip_gen: v7x
topology: tpu7x:2x2x1
jax: 0.10.0
libtpu: 0.0.40
codegen_flags: <defaults>
</compile_context>

<pallas_src>
import functools

import jax
import jax.numpy as jnp
import numpy as np
from jax.experimental import pallas as pl
from jax.experimental.pallas import tpu as pltpu

IN_DIM = 3
HID_DIM = 16
OUT_DIM = 1


def _round_up(n, m):
    return (n + m - 1) // m * m


def _simplenet_kernel(x_ref, w1_ref, b1_ref, w2_ref, b2_ref, o_ref, *,
                      chunk, compute_dtype):
    """One batch tile.

    x_ref : (IN, CB, 128)  VMEM   feature-major; batch element b = row*128 + lane
    w1_ref: (HID, IN)      SMEM   fc1 weight (torch out_features x in_features)
    b1_ref: (HID,)         SMEM   fc1 bias
    w2_ref: (HID,)         SMEM   fc2 weight row
    b2_ref: (1,)           SMEM   fc2 bias
    o_ref : (CB, 128)      VMEM   output tile (lane-dense, unmasked stores)
    """
    cb = o_ref.shape[0]
    n_chunks = cb // chunk

    # Hoist the 81 scalar parameters out of the chunk loop (loop invariant;
    # they sit in sregs / reload cheaply from SMEM on the scalar slots).
    w1 = [[w1_ref[j, i].astype(compute_dtype) for i in range(IN_DIM)]
          for j in range(HID_DIM)]
    b1 = [b1_ref[j].astype(compute_dtype) for j in range(HID_DIM)]
    w2 = [w2_ref[j].astype(compute_dtype) for j in range(HID_DIM)]
    b2 = b2_ref[0]                       # final bias & accumulation stay f32

    def body(c, carry):
        base = pl.multiple_of(c * chunk, chunk)
        xk = x_ref[:, pl.ds(base, chunk), :].astype(compute_dtype)  # (IN,chunk,128)
        xs = [xk[i] for i in range(IN_DIM)]
        acc = jnp.zeros((chunk, 128), jnp.float32)
        # fc1 + ReLU + fc2 fused per hidden unit: the full (HID, chunk, 128)
        # activation is never materialized -> ~10 live vregs, no spills.
        for j in range(HID_DIM):
            h = b1[j]
            for i in range(IN_DIM):
                h = h + w1[j][i] * xs[i]
            acc = acc + (jnp.maximum(h, 0.0) * w2[j]).astype(jnp.float32)
        o_ref[pl.ds(base, chunk), :] = (acc + b2).astype(o_ref.dtype)
        return carry

    jax.lax.fori_loop(0, n_chunks, body, None)


def simplenet_forward_fm(x_fm, w1, b1, w2, b2, *, block_batch=131072,
                         compute_dtype=jnp.float32, out_dtype=jnp.float32,
                         vmem_limit_bytes=None):
    """Dense feature-major path: x_fm is (IN, NC, 128) with NC % 8 == 0.

    Batch element b lives at [:, b // 128, b % 128]; the result is (NC, 128)
    with the same packing.  Production callers should build x in this layout
    upstream so no extra HBM transpose/pad pass is needed.
    """
    in_dim, nc, lanes = x_fm.shape
    assert in_dim == IN_DIM and lanes == 128 and nc % 8 == 0
    assert block_batch % 1024 == 0 and block_batch > 0

    cb = min(block_batch // 128, nc)        # rows (of 128 lanes) per grid step
    chunk = 16 if (np.dtype(compute_dtype) == np.dtype(jnp.bfloat16)
                   and cb % 16 == 0) else 8
    grid = (pl.cdiv(nc, cb),)               # ragged last tile handled by Pallas

    # Explicit VMEM budget: double-buffered x + out tiles (+ headroom),
    # capped so it also fits comfortably inside v7x's 64 MiB physical VMEM.
    if vmem_limit_bytes is None:
        tile_bytes = (IN_DIM * cb * 128 * x_fm.dtype.itemsize
                      + cb * 128 * np.dtype(out_dtype).itemsize)
        vmem_limit_bytes = int(min(max(2 * tile_bytes + (8 << 20), 32 << 20),
                                   48 << 20))

    kernel = functools.partial(_simplenet_kernel, chunk=chunk,
                               compute_dtype=compute_dtype)
    return pl.pallas_call(
        kernel,
        out_shape=jax.ShapeDtypeStruct((nc, 128), out_dtype),
        grid=grid,
        in_specs=[
            pl.BlockSpec((IN_DIM, cb, 128), lambda g: (0, g, 0)),   # x streams
            pl.BlockSpec(memory_space=pltpu.MemorySpace.SMEM),      # w1 resident
            pl.BlockSpec(memory_space=pltpu.MemorySpace.SMEM),      # b1
            pl.BlockSpec(memory_space=pltpu.MemorySpace.SMEM),      # w2
            pl.BlockSpec(memory_space=pltpu.MemorySpace.SMEM),      # b2
        ],
        out_specs=pl.BlockSpec((cb, 128), lambda g: (g, 0)),
        compiler_params=pltpu.CompilerParams(
            dimension_semantics=("parallel",),   # shard tiles over v7x's 2 TCs
            vmem_limit_bytes=vmem_limit_bytes,
        ),
    )(x_fm, w1, b1, w2, b2)


def simplenet_forward(x, w1, b1, w2, b2, **kwargs):
    """Convenience wrapper for PyTorch-layout x: (B, IN) -> (B, OUT).

    NOTE: the transpose/pad/reshape below is a separate XLA pass over x in HBM.
    For large batches, produce x in the dense feature-major (IN, B/128, 128)
    layout upstream and call simplenet_forward_fm directly.
    """
    B = x.shape[0]
    if B == 0:
        return jnp.zeros((0, OUT_DIM), jnp.float32)
    b_pad = _round_up(B, 1024)              # keeps NC a multiple of 8
    x_fm = jnp.pad(x, ((0, b_pad - B), (0, 0))).T.reshape(
        IN_DIM, b_pad // 128, 128)
    out = simplenet_forward_fm(x_fm, w1, b1, w2, b2, **kwargs)
    return out.reshape(b_pad)[:B].reshape(B, OUT_DIM)


def simplenet_reference(x, w1, b1, w2, b2):
    # Same math as the PyTorch module, done without MXU matmuls so the f32
    # reference is exact regardless of the backend's default matmul precision.
    h = jnp.maximum(jnp.sum(x[:, None, :] * w1[None, :, :], axis=-1) + b1, 0.0)
    return jnp.sum(h * w2, axis=-1, keepdims=True) + b2


def init_params(key):
    # Mimics torch.nn.Linear's U(-1/sqrt(fan_in), 1/sqrt(fan_in)) init.
    k1, k2, k3, k4 = jax.random.split(key, 4)
    bound1 = 1.0 / np.sqrt(IN_DIM)
    bound2 = 1.0 / np.sqrt(HID_DIM)
    w1 = jax.random.uniform(k1, (HID_DIM, IN_DIM), jnp.float32, -bound1, bound1)
    b1 = jax.random.uniform(k2, (HID_DIM,), jnp.float32, -bound1, bound1)
    w2 = jax.random.uniform(k3, (HID_DIM,), jnp.float32, -bound2, bound2)
    b2 = jax.random.uniform(k4, (OUT_DIM,), jnp.float32, -bound2, bound2)
    return w1, b1, w2, b2


if __name__ == "__main__":
    key = jax.random.PRNGKey(0)
    k_x, k_p, k_x2 = jax.random.split(key, 3)
    w1, b1, w2, b2 = init_params(k_p)

    # 1) Small demo batch (single grid step).
    x = jax.random.normal(k_x, (8, IN_DIM), jnp.float32)
    out = jax.block_until_ready(simplenet_forward(x, w1, b1, w2, b2))
    ref = simplenet_reference(x, w1, b1, w2, b2)
    assert out.shape == (8, OUT_DIM)
    assert jnp.allclose(out, ref, atol=1e-5, rtol=1e-5)

    # 2) Multi-step grid with a ragged (partial) last tile.
    x2 = jax.random.normal(k_x2, (5000, IN_DIM), jnp.float32)
    out2 = jax.block_until_ready(
        simplenet_forward(x2, w1, b1, w2, b2, block_batch=2048))
    ref2 = simplenet_reference(x2, w1, b1, w2, b2)
    assert out2.shape == (5000, OUT_DIM)
    assert jnp.allclose(out2, ref2, atol=1e-5, rtol=1e-5)

    # 3) bf16 VPU compute path (v6e/v7x optimization; keep f32 on v5e).
    out_bf16 = jax.block_until_ready(
        simplenet_forward(x, w1, b1, w2, b2, compute_dtype=jnp.bfloat16))
    assert jnp.allclose(out_bf16, ref, atol=5e-2, rtol=5e-2)

    print("KERNEL_OK")
</pallas_src>

<mosaic_0001>
module attributes {stable_mosaic.version = 11 : i64} {
  func.func @_simplenet_kernel(%arg0: i32, %arg1: memref<3x8x128xf32, #tpu.memory_space<vmem>>, %arg2: memref<16x3xf32, #tpu.memory_space<smem>>, %arg3: memref<16xf32, #tpu.memory_space<smem>>, %arg4: memref<16xf32, #tpu.memory_space<smem>>, %arg5: memref<1xf32, #tpu.memory_space<smem>>, %arg6: memref<8x128xf32, #tpu.memory_space<vmem>>) attributes {dimension_semantics = [#tpu.dimension_semantics<parallel>], iteration_bounds = array<i64: 1>, scalar_prefetch = 0 : i64, scratch_operands = 0 : i64, tpu.core_type = #tpu.core_type<tc>, window_params = [{transform_indices = @transform_0, window_bounds = array<i64: 3, 8, 128>}, {transform_indices = @transform_1, window_bounds = array<i64: 16, 3>}, {transform_indices = @transform_2, window_bounds = array<i64: 16>}, {transform_indices = @transform_3, window_bounds = array<i64: 16>}, {transform_indices = @transform_4, window_bounds = array<i64: 1>}, {transform_indices = @transform_5, window_bounds = array<i64: 8, 128>}]} {
    %c0 = arith.constant 0 : index
    %c0_0 = arith.constant 0 : index
    %0 = memref.load %arg2[%c0, %c0_0] : memref<16x3xf32, #tpu.memory_space<smem>>
    %c0_1 = arith.constant 0 : index
    %c1 = arith.constant 1 : index
    %1 = memref.load %arg2[%c0_1, %c1] : memref<16x3xf32, #tpu.memory_space<smem>>
    %c0_2 = arith.constant 0 : index
    %c2 = arith.constant 2 : index
    %2 = memref.load %arg2[%c0_2, %c2] : memref<16x3xf32, #tpu.memory_space<smem>>
    %c1_3 = arith.constant 1 : index
    %c0_4 = arith.constant 0 : index
    %3 = memref.load %arg2[%c1_3, %c0_4] : memref<16x3xf32, #tpu.memory_space<smem>>
    %c1_5 = arith.constant 1 : index
    %c1_6 = arith.constant 1 : index
    %4 = memref.load %arg2[%c1_5, %c1_6] : memref<16x3xf32, #tpu.memory_space<smem>>
    %c1_7 = arith.constant 1 : index
    %c2_8 = arith.constant 2 : index
    %5 = memref.load %arg2[%c1_7, %c2_8] : memref<16x3xf32, #tpu.memory_space<smem>>
    %c2_9 = arith.constant 2 : index
    %c0_10 = arith.constant 0 : index
    %6 = memref.load %arg2[%c2_9, %c0_10] : memref<16x3xf32, #tpu.memory_space<smem>>
    %c2_11 = arith.constant 2 : index
    %c1_12 = arith.constant 1 : index
    %7 = memref.load %arg2[%c2_11, %c1_12] : memref<16x3xf32, #tpu.memory_space<smem>>
    %c2_13 = arith.constant 2 : index
    %c2_14 = arith.constant 2 : index
    %8 = memref.load %arg2[%c2_13, %c2_14] : memref<16x3xf32, #tpu.memory_space<smem>>
    %c3 = arith.constant 3 : index
    %c0_15 = arith.constant 0 : index
    %9 = memref.load %arg2[%c3, %c0_15] : memref<16x3xf32, #tpu.memory_space<smem>>
    %c3_16 = arith.constant 3 : index
    %c1_17 = arith.constant 1 : index
    %10 = memref.load %arg2[%c3_16, %c1_17] : memref<16x3xf32, #tpu.memory_space<smem>>
    %c3_18 = arith.constant 3 : index
    %c2_19 = arith.constant 2 : index
    %11 = memref.load %arg2[%c3_18, %c2_19] : memref<16x3xf32, #tpu.memory_space<smem>>
    %c4 = arith.constant 4 : index
    %c0_20 = arith.constant 0 : index
    %12 = memref.load %arg2[%c4, %c0_20] : memref<16x3xf32, #tpu.memory_space<smem>>
    %c4_21 = arith.constant 4 : index
    %c1_22 = arith.constant 1 : index
    %13 = memref.load %arg2[%c4_21, %c1_22] : memref<16x3xf32, #tpu.memory_space<smem>>
    %c4_23 = arith.constant 4 : index
    %c2_24 = arith.constant 2 : index
    %14 = memref.load %arg2[%c4_23, %c2_24] : memref<16x3xf32, #tpu.memory_space<smem>>
    %c5 = arith.constant 5 : index
    %c0_25 = arith.constant 0 : index
    %15 = memref.load %arg2[%c5, %c0_25] : memref<16x3xf32, #tpu.memory_space<smem>>
    %c5_26 = arith.constant 5 : index
    %c1_27 = arith.constant 1 : index
    %16 = memref.load %arg2[%c5_26, %c1_27] : memref<16x3xf32, #tpu.memory_space<smem>>
    %c5_28 = arith.constant 5 : index
    %c2_29 = arith.constant 2 : index
    %17 = memref.load %arg2[%c5_28, %c2_29] : memref<16x3xf32, #tpu.memory_space<smem>>
    %c6 = arith.constant 6 : index
    %c0_30 = arith.constant 0 : index
    %18 = memref.load %arg2[%c6, %c0_30] : memref<16x3xf32, #tpu.memory_space<smem>>
    %c6_31 = arith.constant 6 : index
    %c1_32 = arith.constant 1 : index
    %19 = memref.load %arg2[%c6_31, %c1_32] : memref<16x3xf32, #tpu.memory_space<smem>>
    %c6_33 = arith.constant 6 : index
    %c2_34 = arith.constant 2 : index
    %20 = memref.load %arg2[%c6_33, %c2_34] : memref<16x3xf32, #tpu.memory_space<smem>>
    %c7 = arith.constant 7 : index
    %c0_35 = arith.constant 0 : index
    %21 = memref.load %arg2[%c7, %c0_35] : memref<16x3xf32, #tpu.memory_space<smem>>
    %c7_36 = arith.constant 7 : index
    %c1_37 = arith.constant 1 : index
    %22 = memref.load %arg2[%c7_36, %c1_37] : memref<16x3xf32, #tpu.memory_space<smem>>
    %c7_38 = arith.constant 7 : index
    %c2_39 = arith.constant 2 : index
    %23 = memref.load %arg2[%c7_38, %c2_39] : memref<16x3xf32, #tpu.memory_space<smem>>
    %c8 = arith.constant 8 : index
    %c0_40 = arith.constant 0 : index
    %24 = memref.load %arg2[%c8, %c0_40] : memref<16x3xf32, #tpu.memory_space<smem>>
    %c8_41 = arith.constant 8 : index
    %c1_42 = arith.constant 1 : index
    %25 = memref.load %arg2[%c8_41, %c1_42] : memref<16x3xf32, #tpu.memory_space<smem>>
    %c8_43 = arith.constant 8 : index
    %c2_44 = arith.constant 2 : index
    %26 = memref.load %arg2[%c8_43, %c2_44] : memref<16x3xf32, #tpu.memory_space<smem>>
    %c9 = arith.constant 9 : index
    %c0_45 = arith.constant 0 : index
    %27 = memref.load %arg2[%c9, %c0_45] : memref<16x3xf32, #tpu.memory_space<smem>>
    %c9_46 = arith.constant 9 : index
    %c1_47 = arith.constant 1 : index
    %28 = memref.load %arg2[%c9_46, %c1_47] : memref<16x3xf32, #tpu.memory_space<smem>>
    %c9_48 = arith.constant 9 : index
    %c2_49 = arith.constant 2 : index
    %29 = memref.load %arg2[%c9_48, %c2_49] : memref<16x3xf32, #tpu.memory_space<smem>>
    %c10 = arith.constant 10 : index
    %c0_50 = arith.constant 0 : index
    %30 = memref.load %arg2[%c10, %c0_50] : memref<16x3xf32, #tpu.memory_space<smem>>
    %c10_51 = arith.constant 10 : index
    %c1_52 = arith.constant 1 : index
    %31 = memref.load %arg2[%c10_51, %c1_52] : memref<16x3xf32, #tpu.memory_space<smem>>
    %c10_53 = arith.constant 10 : index
    %c2_54 = arith.constant 2 : index
    %32 = memref.load %arg2[%c10_53, %c2_54] : memref<16x3xf32, #tpu.memory_space<smem>>
    %c11 = arith.constant 11 : index
    %c0_55 = arith.constant 0 : index
    %33 = memref.load %arg2[%c11, %c0_55] : memref<16x3xf32, #tpu.memory_space<smem>>
    %c11_56 = arith.constant 11 : index
    %c1_57 = arith.constant 1 : index
    %34 = memref.load %arg2[%c11_56, %c1_57] : memref<16x3xf32, #tpu.memory_space<smem>>
    %c11_58 = arith.constant 11 : index
    %c2_59 = arith.constant 2 : index
    %35 = memref.load %arg2[%c11_58, %c2_59] : memref<16x3xf32, #tpu.memory_space<smem>>
    %c12 = arith.constant 12 : index
    %c0_60 = arith.constant 0 : index
    %36 = memref.load %arg2[%c12, %c0_60] : memref<16x3xf32, #tpu.memory_space<smem>>
    %c12_61 = arith.constant 12 : index
    %c1_62 = arith.constant 1 : index
    %37 = memref.load %arg2[%c12_61, %c1_62] : memref<16x3xf32, #tpu.memory_space<smem>>
    %c12_63 = arith.constant 12 : index
    %c2_64 = arith.constant 2 : index
    %38 = memref.load %arg2[%c12_63, %c2_64] : memref<16x3xf32, #tpu.memory_space<smem>>
    %c13 = arith.constant 13 : index
    %c0_65 = arith.constant 0 : index
    %39 = memref.load %arg2[%c13, %c0_65] : memref<16x3xf32, #tpu.memory_space<smem>>
    %c13_66 = arith.constant 13 : index
    %c1_67 = arith.constant 1 : index
    %40 = memref.load %arg2[%c13_66, %c1_67] : memref<16x3xf32, #tpu.memory_space<smem>>
    %c13_68 = arith.constant 13 : index
    %c2_69 = arith.constant 2 : index
    %41 = memref.load %arg2[%c13_68, %c2_69] : memref<16x3xf32, #tpu.memory_space<smem>>
    %c14 = arith.constant 14 : index
    %c0_70 = arith.constant 0 : index
    %42 = memref.load %arg2[%c14, %c0_70] : memref<16x3xf32, #tpu.memory_space<smem>>
    %c14_71 = arith.constant 14 : index
    %c1_72 = arith.constant 1 : index
    %43 = memref.load %arg2[%c14_71, %c1_72] : memref<16x3xf32, #tpu.memory_space<smem>>
    %c14_73 = arith.constant 14 : index
    %c2_74 = arith.constant 2 : index
    %44 = memref.load %arg2[%c14_73, %c2_74] : memref<16x3xf32, #tpu.memory_space<smem>>
    %c15 = arith.constant 15 : index
    %c0_75 = arith.constant 0 : index
    %45 = memref.load %arg2[%c15, %c0_75] : memref<16x3xf32, #tpu.memory_space<smem>>
    %c15_76 = arith.constant 15 : index
    %c1_77 = arith.constant 1 : index
    %46 = memref.load %arg2[%c15_76, %c1_77] : memref<16x3xf32, #tpu.memory_space<smem>>
    %c15_78 = arith.constant 15 : index
    %c2_79 = arith.constant 2 : index
    %47 = memref.load %arg2[%c15_78, %c2_79] : memref<16x3xf32, #tpu.memory_space<smem>>
    %c0_80 = arith.constant 0 : index
    %48 = memref.load %arg3[%c0_80] : memref<16xf32, #tpu.memory_space<smem>>
    %c1_81 = arith.constant 1 : index
    %49 = memref.load %arg3[%c1_81] : memref<16xf32, #tpu.memory_space<smem>>
    %c2_82 = arith.constant 2 : index
    %50 = memref.load %arg3[%c2_82] : memref<16xf32, #tpu.memory_space<smem>>
    %c3_83 = arith.constant 3 : index
    %51 = memref.load %arg3[%c3_83] : memref<16xf32, #tpu.memory_space<smem>>
    %c4_84 = arith.constant 4 : index
    %52 = memref.load %arg3[%c4_84] : memref<16xf32, #tpu.memory_space<smem>>
    %c5_85 = arith.constant 5 : index
    %53 = memref.load %arg3[%c5_85] : memref<16xf32, #tpu.memory_space<smem>>
    %c6_86 = arith.constant 6 : index
    %54 = memref.load %arg3[%c6_86] : memref<16xf32, #tpu.memory_space<smem>>
    %c7_87 = arith.constant 7 : index
    %55 = memref.load %arg3[%c7_87] : memref<16xf32, #tpu.memory_space<smem>>
    %c8_88 = arith.constant 8 : index
    %56 = memref.load %arg3[%c8_88] : memref<16xf32, #tpu.memory_space<smem>>
    %c9_89 = arith.constant 9 : index
    %57 = memref.load %arg3[%c9_89] : memref<16xf32, #tpu.memory_space<smem>>
    %c10_90 = arith.constant 10 : index
    %58 = memref.load %arg3[%c10_90] : memref<16xf32, #tpu.memory_space<smem>>
    %c11_91 = arith.constant 11 : index
    %59 = memref.load %arg3[%c11_91] : memref<16xf32, #tpu.memory_space<smem>>
    %c12_92 = arith.constant 12 : index
    %60 = memref.load %arg3[%c12_92] : memref<16xf32, #tpu.memory_space<smem>>
    %c13_93 = arith.constant 13 : index
    %61 = memref.load %arg3[%c13_93] : memref<16xf32, #tpu.memory_space<smem>>
    %c14_94 = arith.constant 14 : index
    %62 = memref.load %arg3[%c14_94] : memref<16xf32, #tpu.memory_space<smem>>
    %c15_95 = arith.constant 15 : index
    %63 = memref.load %arg3[%c15_95] : memref<16xf32, #tpu.memory_space<smem>>
    %c0_96 = arith.constant 0 : index
    %64 = memref.load %arg4[%c0_96] : memref<16xf32, #tpu.memory_space<smem>>
    %c1_97 = arith.constant 1 : index
    %65 = memref.load %arg4[%c1_97] : memref<16xf32, #tpu.memory_space<smem>>
    %c2_98 = arith.constant 2 : index
    %66 = memref.load %arg4[%c2_98] : memref<16xf32, #tpu.memory_space<smem>>
    %c3_99 = arith.constant 3 : index
    %67 = memref.load %arg4[%c3_99] : memref<16xf32, #tpu.memory_space<smem>>
    %c4_100 = arith.constant 4 : index
    %68 = memref.load %arg4[%c4_100] : memref<16xf32, #tpu.memory_space<smem>>
    %c5_101 = arith.constant 5 : index
    %69 = memref.load %arg4[%c5_101] : memref<16xf32, #tpu.memory_space<smem>>
    %c6_102 = arith.constant 6 : index
    %70 = memref.load %arg4[%c6_102] : memref<16xf32, #tpu.memory_space<smem>>
    %c7_103 = arith.constant 7 : index
    %71 = memref.load %arg4[%c7_103] : memref<16xf32, #tpu.memory_space<smem>>
    %c8_104 = arith.constant 8 : index
    %72 = memref.load %arg4[%c8_104] : memref<16xf32, #tpu.memory_space<smem>>
    %c9_105 = arith.constant 9 : index
    %73 = memref.load %arg4[%c9_105] : memref<16xf32, #tpu.memory_space<smem>>
    %c10_106 = arith.constant 10 : index
    %74 = memref.load %arg4[%c10_106] : memref<16xf32, #tpu.memory_space<smem>>
    %c11_107 = arith.constant 11 : index
    %75 = memref.load %arg4[%c11_107] : memref<16xf32, #tpu.memory_space<smem>>
    %c12_108 = arith.constant 12 : index
    %76 = memref.load %arg4[%c12_108] : memref<16xf32, #tpu.memory_space<smem>>
    %c13_109 = arith.constant 13 : index
    %77 = memref.load %arg4[%c13_109] : memref<16xf32, #tpu.memory_space<smem>>
    %c14_110 = arith.constant 14 : index
    %78 = memref.load %arg4[%c14_110] : memref<16xf32, #tpu.memory_space<smem>>
    %c15_111 = arith.constant 15 : index
    %79 = memref.load %arg4[%c15_111] : memref<16xf32, #tpu.memory_space<smem>>
    %c0_112 = arith.constant 0 : index
    %80 = memref.load %arg5[%c0_112] : memref<1xf32, #tpu.memory_space<smem>>
    %c0_i32 = arith.constant 0 : i32
    %c8_i32 = arith.constant 8 : i32
    %81 = arith.muli %c0_i32, %c8_i32 : i32
    %82 = tpu.assume_multiple %81, 8 : i32
    %c0_113 = arith.constant 0 : index
    %83 = arith.index_cast %82 : i32 to index
    %c0_114 = arith.constant 0 : index
    %84 = vector.load %arg1[%c0_113, %83, %c0_114] : memref<3x8x128xf32, #tpu.memory_space<vmem>>, vector<3x8x128xf32>
    %85 = vector.extract_strided_slice %84 {offsets = [0, 0, 0], sizes = [1, 8, 128], strides = [1, 1, 1]} : vector<3x8x128xf32> to vector<1x8x128xf32>
    %86 = vector.shape_cast %85 : vector<1x8x128xf32> to vector<8x128xf32>
    %87 = vector.extract_strided_slice %84 {offsets = [1, 0, 0], sizes = [1, 8, 128], strides = [1, 1, 1]} : vector<3x8x128xf32> to vector<1x8x128xf32>
    %88 = vector.shape_cast %87 : vector<1x8x128xf32> to vector<8x128xf32>
    %89 = vector.extract_strided_slice %84 {offsets = [2, 0, 0], sizes = [1, 8, 128], strides = [1, 1, 1]} : vector<3x8x128xf32> to vector<1x8x128xf32>
    %90 = vector.shape_cast %89 : vector<1x8x128xf32> to vector<8x128xf32>
    %cst = arith.constant 0.000000e+00 : f32
    %91 = vector.broadcast %cst : f32 to vector<8x128xf32>
    %92 = vector.broadcast %0 : f32 to vector<8x128xf32>
    %93 = arith.mulf %92, %86 : vector<8x128xf32>
    %94 = vector.broadcast %48 : f32 to vector<8x128xf32>
    %95 = arith.addf %94, %93 : vector<8x128xf32>
    %96 = vector.broadcast %1 : f32 to vector<8x128xf32>
    %97 = arith.mulf %96, %88 : vector<8x128xf32>
    %98 = arith.addf %95, %97 : vector<8x128xf32>
    %99 = vector.broadcast %2 : f32 to vector<8x128xf32>
    %100 = arith.mulf %99, %90 : vector<8x128xf32>
    %101 = arith.addf %98, %100 : vector<8x128xf32>
    %cst_115 = arith.constant 0.000000e+00 : f32
    %102 = vector.broadcast %cst_115 : f32 to vector<8x128xf32>
    %103 = arith.maximumf %101, %102 : vector<8x128xf32>
    %104 = vector.broadcast %64 : f32 to vector<8x128xf32>
    %105 = arith.mulf %103, %104 : vector<8x128xf32>
    %106 = arith.addf %91, %105 : vector<8x128xf32>
    %107 = vector.broadcast %3 : f32 to vector<8x128xf32>
    %108 = arith.mulf %107, %86 : vector<8x128xf32>
    %109 = vector.broadcast %49 : f32 to vector<8x128xf32>
    %110 = arith.addf %109, %108 : vector<8x128xf32>
    %111 = vector.broadcast %4 : f32 to vector<8x128xf32>
    %112 = arith.mulf %111, %88 : vector<8x128xf32>
    %113 = arith.addf %110, %112 : vector<8x128xf32>
    %114 = vector.broadcast %5 : f32 to vector<8x128xf32>
    %115 = arith.mulf %114, %90 : vector<8x128xf32>
    %116 = arith.addf %113, %115 : vector<8x128xf32>
    %cst_116 = arith.constant 0.000000e+00 : f32
    %117 = vector.broadcast %cst_116 : f32 to vector<8x128xf32>
    %118 = arith.maximumf %116, %117 : vector<8x128xf32>
    %119 = vector.broadcast %65 : f32 to vector<8x128xf32>
    %120 = arith.mulf %118, %119 : vector<8x128xf32>
    %121 = arith.addf %106, %120 : vector<8x128xf32>
    %122 = vector.broadcast %6 : f32 to vector<8x128xf32>
    %123 = arith.mulf %122, %86 : vector<8x128xf32>
    %124 = vector.broadcast %50 : f32 to vector<8x128xf32>
    %125 = arith.addf %124, %123 : vector<8x128xf32>
    %126 = vector.broadcast %7 : f32 to vector<8x128xf32>
    %127 = arith.mulf %126, %88 : vector<8x128xf32>
    %128 = arith.addf %125, %127 : vector<8x128xf32>
    %129 = vector.broadcast %8 : f32 to vector<8x128xf32>
    %130 = arith.mulf %129, %90 : vector<8x128xf32>
    %131 = arith.addf %128, %130 : vector<8x128xf32>
    %cst_117 = arith.constant 0.000000e+00 : f32
    %132 = vector.broadcast %cst_117 : f32 to vector<8x128xf32>
    %133 = arith.maximumf %131, %132 : vector<8x128xf32>
    %134 = vector.broadcast %66 : f32 to vector<8x128xf32>
    %135 = arith.mulf %133, %134 : vector<8x128xf32>
    %136 = arith.addf %121, %135 : vector<8x128xf32>
    %137 = vector.broadcast %9 : f32 to vector<8x128xf32>
    %138 = arith.mulf %137, %86 : vector<8x128xf32>
    %139 = vector.broadcast %51 : f32 to vector<8x128xf32>
    %140 = arith.addf %139, %138 : vector<8x128xf32>
    %141 = vector.broadcast %10 : f32 to vector<8x128xf32>
    %142 = arith.mulf %141, %88 : vector<8x128xf32>
    %143 = arith.addf %140, %142 : vector<8x128xf32>
    %144 = vector.broadcast %11 : f32 to vector<8x128xf32>
    %145 = arith.mulf %144, %90 : vector<8x128xf32>
    %146 = arith.addf %143, %145 : vector<8x128xf32>
    %cst_118 = arith.constant 0.000000e+00 : f32
    %147 = vector.broadcast %cst_118 : f32 to vector<8x128xf32>
    %148 = arith.maximumf %146, %147 : vector<8x128xf32>
    %149 = vector.broadcast %67 : f32 to vector<8x128xf32>
    %150 = arith.mulf %148, %149 : vector<8x128xf32>
    %151 = arith.addf %136, %150 : vector<8x128xf32>
    %152 = vector.broadcast %12 : f32 to vector<8x128xf32>
    %153 = arith.mulf %152, %86 : vector<8x128xf32>
    %154 = vector.broadcast %52 : f32 to vector<8x128xf32>
    %155 = arith.addf %154, %153 : vector<8x128xf32>
    %156 = vector.broadcast %13 : f32 to vector<8x128xf32>
    %157 = arith.mulf %156, %88 : vector<8x128xf32>
    %158 = arith.addf %155, %157 : vector<8x128xf32>
    %159 = vector.broadcast %14 : f32 to vector<8x128xf32>
    %160 = arith.mulf %159, %90 : vector<8x128xf32>
    %161 = arith.addf %158, %160 : vector<8x128xf32>
    %cst_119 = arith.constant 0.000000e+00 : f32
    %162 = vector.broadcast %cst_119 : f32 to vector<8x128xf32>
    %163 = arith.maximumf %161, %162 : vector<8x128xf32>
    %164 = vector.broadcast %68 : f32 to vector<8x128xf32>
    %165 = arith.mulf %163, %164 : vector<8x128xf32>
    %166 = arith.addf %151, %165 : vector<8x128xf32>
    %167 = vector.broadcast %15 : f32 to vector<8x128xf32>
    %168 = arith.mulf %167, %86 : vector<8x128xf32>
    %169 = vector.broadcast %53 : f32 to vector<8x128xf32>
    %170 = arith.addf %169, %168 : vector<8x128xf32>
    %171 = vector.broadcast %16 : f32 to vector<8x128xf32>
    %172 = arith.mulf %171, %88 : vector<8x128xf32>
    %173 = arith.addf %170, %172 : vector<8x128xf32>
    %174 = vector.broadcast %17 : f32 to vector<8x128xf32>
    %175 = arith.mulf %174, %90 : vector<8x128xf32>
    %176 = arith.addf %173, %175 : vector<8x128xf32>
    %cst_120 = arith.constant 0.000000e+00 : f32
    %177 = vector.broadcast %cst_120 : f32 to vector<8x128xf32>
    %178 = arith.maximumf %176, %177 : vector<8x128xf32>
    %179 = vector.broadcast %69 : f32 to vector<8x128xf32>
    %180 = arith.mulf %178, %179 : vector<8x128xf32>
    %181 = arith.addf %166, %180 : vector<8x128xf32>
    %182 = vector.broadcast %18 : f32 to vector<8x128xf32>
    %183 = arith.mulf %182, %86 : vector<8x128xf32>
    %184 = vector.broadcast %54 : f32 to vector<8x128xf32>
    %185 = arith.addf %184, %183 : vector<8x128xf32>
    %186 = vector.broadcast %19 : f32 to vector<8x128xf32>
    %187 = arith.mulf %186, %88 : vector<8x128xf32>
    %188 = arith.addf %185, %187 : vector<8x128xf32>
    %189 = vector.broadcast %20 : f32 to vector<8x128xf32>
    %190 = arith.mulf %189, %90 : vector<8x128xf32>
    %191 = arith.addf %188, %190 : vector<8x128xf32>
    %cst_121 = arith.constant 0.000000e+00 : f32
    %192 = vector.broadcast %cst_121 : f32 to vector<8x128xf32>
    %193 = arith.maximumf %191, %192 : vector<8x128xf32>
    %194 = vector.broadcast %70 : f32 to vector<8x128xf32>
    %195 = arith.mulf %193, %194 : vector<8x128xf32>
    %196 = arith.addf %181, %195 : vector<8x128xf32>
    %197 = vector.broadcast %21 : f32 to vector<8x128xf32>
    %198 = arith.mulf %197, %86 : vector<8x128xf32>
    %199 = vector.broadcast %55 : f32 to vector<8x128xf32>
    %200 = arith.addf %199, %198 : vector<8x128xf32>
    %201 = vector.broadcast %22 : f32 to vector<8x128xf32>
    %202 = arith.mulf %201, %88 : vector<8x128xf32>
    %203 = arith.addf %200, %202 : vector<8x128xf32>
    %204 = vector.broadcast %23 : f32 to vector<8x128xf32>
    %205 = arith.mulf %204, %90 : vector<8x128xf32>
    %206 = arith.addf %203, %205 : vector<8x128xf32>
    %cst_122 = arith.constant 0.000000e+00 : f32
    %207 = vector.broadcast %cst_122 : f32 to vector<8x128xf32>
    %208 = arith.maximumf %206, %207 : vector<8x128xf32>
    %209 = vector.broadcast %71 : f32 to vector<8x128xf32>
    %210 = arith.mulf %208, %209 : vector<8x128xf32>
    %211 = arith.addf %196, %210 : vector<8x128xf32>
    %212 = vector.broadcast %24 : f32 to vector<8x128xf32>
    %213 = arith.mulf %212, %86 : vector<8x128xf32>
    %214 = vector.broadcast %56 : f32 to vector<8x128xf32>
    %215 = arith.addf %214, %213 : vector<8x128xf32>
    %216 = vector.broadcast %25 : f32 to vector<8x128xf32>
    %217 = arith.mulf %216, %88 : vector<8x128xf32>
    %218 = arith.addf %215, %217 : vector<8x128xf32>
    %219 = vector.broadcast %26 : f32 to vector<8x128xf32>
    %220 = arith.mulf %219, %90 : vector<8x128xf32>
    %221 = arith.addf %218, %220 : vector<8x128xf32>
    %cst_123 = arith.constant 0.000000e+00 : f32
    %222 = vector.broadcast %cst_123 : f32 to vector<8x128xf32>
    %223 = arith.maximumf %221, %222 : vector<8x128xf32>
    %224 = vector.broadcast %72 : f32 to vector<8x128xf32>
    %225 = arith.mulf %223, %224 : vector<8x128xf32>
    %226 = arith.addf %211, %225 : vector<8x128xf32>
    %227 = vector.broadcast %27 : f32 to vector<8x128xf32>
    %228 = arith.mulf %227, %86 : vector<8x128xf32>
    %229 = vector.broadcast %57 : f32 to vector<8x128xf32>
    %230 = arith.addf %229, %228 : vector<8x128xf32>
    %231 = vector.broadcast %28 : f32 to vector<8x128xf32>
    %232 = arith.mulf %231, %88 : vector<8x128xf32>
    %233 = arith.addf %230, %232 : vector<8x128xf32>
    %234 = vector.broadcast %29 : f32 to vector<8x128xf32>
    %235 = arith.mulf %234, %90 : vector<8x128xf32>
    %236 = arith.addf %233, %235 : vector<8x128xf32>
    %cst_124 = arith.constant 0.000000e+00 : f32
    %237 = vector.broadcast %cst_124 : f32 to vector<8x128xf32>
    %238 = arith.maximumf %236, %237 : vector<8x128xf32>
    %239 = vector.broadcast %73 : f32 to vector<8x128xf32>
    %240 = arith.mulf %238, %239 : vector<8x128xf32>
    %241 = arith.addf %226, %240 : vector<8x128xf32>
    %242 = vector.broadcast %30 : f32 to vector<8x128xf32>
    %243 = arith.mulf %242, %86 : vector<8x128xf32>
    %244 = vector.broadcast %58 : f32 to vector<8x128xf32>
    %245 = arith.addf %244, %243 : vector<8x128xf32>
    %246 = vector.broadcast %31 : f32 to vector<8x128xf32>
    %247 = arith.mulf %246, %88 : vector<8x128xf32>
    %248 = arith.addf %245, %247 : vector<8x128xf32>
    %249 = vector.broadcast %32 : f32 to vector<8x128xf32>
    %250 = arith.mulf %249, %90 : vector<8x128xf32>
    %251 = arith.addf %248, %250 : vector<8x128xf32>
    %cst_125 = arith.constant 0.000000e+00 : f32
    %252 = vector.broadcast %cst_125 : f32 to vector<8x128xf32>
    %253 = arith.maximumf %251, %252 : vector<8x128xf32>
    %254 = vector.broadcast %74 : f32 to vector<8x128xf32>
    %255 = arith.mulf %253, %254 : vector<8x128xf32>
    %256 = arith.addf %241, %255 : vector<8x128xf32>
    %257 = vector.broadcast %33 : f32 to vector<8x128xf32>
    %258 = arith.mulf %257, %86 : vector<8x128xf32>
    %259 = vector.broadcast %59 : f32 to vector<8x128xf32>
    %260 = arith.addf %259, %258 : vector<8x128xf32>
    %261 = vector.broadcast %34 : f32 to vector<8x128xf32>
    %262 = arith.mulf %261, %88 : vector<8x128xf32>
    %263 = arith.addf %260, %262 : vector<8x128xf32>
    %264 = vector.broadcast %35 : f32 to vector<8x128xf32>
    %265 = arith.mulf %264, %90 : vector<8x128xf32>
    %266 = arith.addf %263, %265 : vector<8x128xf32>
    %cst_126 = arith.constant 0.000000e+00 : f32
    %267 = vector.broadcast %cst_126 : f32 to vector<8x128xf32>
    %268 = arith.maximumf %266, %267 : vector<8x128xf32>
    %269 = vector.broadcast %75 : f32 to vector<8x128xf32>
    %270 = arith.mulf %268, %269 : vector<8x128xf32>
    %271 = arith.addf %256, %270 : vector<8x128xf32>
    %272 = vector.broadcast %36 : f32 to vector<8x128xf32>
    %273 = arith.mulf %272, %86 : vector<8x128xf32>
    %274 = vector.broadcast %60 : f32 to vector<8x128xf32>
    %275 = arith.addf %274, %273 : vector<8x128xf32>
    %276 = vector.broadcast %37 : f32 to vector<8x128xf32>
    %277 = arith.mulf %276, %88 : vector<8x128xf32>
    %278 = arith.addf %275, %277 : vector<8x128xf32>
    %279 = vector.broadcast %38 : f32 to vector<8x128xf32>
    %280 = arith.mulf %279, %90 : vector<8x128xf32>
    %281 = arith.addf %278, %280 : vector<8x128xf32>
    %cst_127 = arith.constant 0.000000e+00 : f32
    %282 = vector.broadcast %cst_127 : f32 to vector<8x128xf32>
    %283 = arith.maximumf %281, %282 : vector<8x128xf32>
    %284 = vector.broadcast %76 : f32 to vector<8x128xf32>
    %285 = arith.mulf %283, %284 : vector<8x128xf32>
    %286 = arith.addf %271, %285 : vector<8x128xf32>
    %287 = vector.broadcast %39 : f32 to vector<8x128xf32>
    %288 = arith.mulf %287, %86 : vector<8x128xf32>
    %289 = vector.broadcast %61 : f32 to vector<8x128xf32>
    %290 = arith.addf %289, %288 : vector<8x128xf32>
    %291 = vector.broadcast %40 : f32 to vector<8x128xf32>
    %292 = arith.mulf %291, %88 : vector<8x128xf32>
    %293 = arith.addf %290, %292 : vector<8x128xf32>
    %294 = vector.broadcast %41 : f32 to vector<8x128xf32>
    %295 = arith.mulf %294, %90 : vector<8x128xf32>
    %296 = arith.addf %293, %295 : vector<8x128xf32>
    %cst_128 = arith.constant 0.000000e+00 : f32
    %297 = vector.broadcast %cst_128 : f32 to vector<8x128xf32>
    %298 = arith.maximumf %296, %297 : vector<8x128xf32>
    %299 = vector.broadcast %77 : f32 to vector<8x128xf32>
    %300 = arith.mulf %298, %299 : vector<8x128xf32>
    %301 = arith.addf %286, %300 : vector<8x128xf32>
    %302 = vector.broadcast %42 : f32 to vector<8x128xf32>
    %303 = arith.mulf %302, %86 : vector<8x128xf32>
    %304 = vector.broadcast %62 : f32 to vector<8x128xf32>
    %305 = arith.addf %304, %303 : vector<8x128xf32>
    %306 = vector.broadcast %43 : f32 to vector<8x128xf32>
    %307 = arith.mulf %306, %88 : vector<8x128xf32>
    %308 = arith.addf %305, %307 : vector<8x128xf32>
    %309 = vector.broadcast %44 : f32 to vector<8x128xf32>
    %310 = arith.mulf %309, %90 : vector<8x128xf32>
    %311 = arith.addf %308, %310 : vector<8x128xf32>
    %cst_129 = arith.constant 0.000000e+00 : f32
    %312 = vector.broadcast %cst_129 : f32 to vector<8x128xf32>
    %313 = arith.maximumf %311, %312 : vector<8x128xf32>
    %314 = vector.broadcast %78 : f32 to vector<8x128xf32>
    %315 = arith.mulf %313, %314 : vector<8x128xf32>
    %316 = arith.addf %301, %315 : vector<8x128xf32>
    %317 = vector.broadcast %45 : f32 to vector<8x128xf32>
    %318 = arith.mulf %317, %86 : vector<8x128xf32>
    %319 = vector.broadcast %63 : f32 to vector<8x128xf32>
    %320 = arith.addf %319, %318 : vector<8x128xf32>
    %321 = vector.broadcast %46 : f32 to vector<8x128xf32>
    %322 = arith.mulf %321, %88 : vector<8x128xf32>
    %323 = arith.addf %320, %322 : vector<8x128xf32>
    %324 = vector.broadcast %47 : f32 to vector<8x128xf32>
    %325 = arith.mulf %324, %90 : vector<8x128xf32>
    %326 = arith.addf %323, %325 : vector<8x128xf32>
    %cst_130 = arith.constant 0.000000e+00 : f32
    %327 = vector.broadcast %cst_130 : f32 to vector<8x128xf32>
    %328 = arith.maximumf %326, %327 : vector<8x128xf32>
    %329 = vector.broadcast %79 : f32 to vector<8x128xf32>
    %330 = arith.mulf %328, %329 : vector<8x128xf32>
    %331 = arith.addf %316, %330 : vector<8x128xf32>
    %332 = vector.broadcast %80 : f32 to vector<8x128xf32>
    %333 = arith.addf %331, %332 : vector<8x128xf32>
    %334 = arith.index_cast %82 : i32 to index
    %c0_131 = arith.constant 0 : index
    %335 = vector.load %arg6[%334, %c0_131] : memref<8x128xf32, #tpu.memory_space<vmem>>, vector<8x128xf32>
    tpu.vector_store %arg6[%334, %c0_131], %333 {strides = array<i32>} : memref<8x128xf32, #tpu.memory_space<vmem>>, vector<8x128xf32>,
    %c1_i32 = arith.constant 1 : i32
    return
  }
  func.func @transform_0(%arg0: i32) -> (i32, i32, i32) {
    %c0_i32 = arith.constant 0 : i32
    %c0_i32_0 = arith.constant 0 : i32
    %c0_i32_1 = arith.constant 0 : i32
    return %c0_i32, %arg0, %c0_i32_0 : i32, i32, i32
  }
  func.func @transform_1(%arg0: i32) -> (i32, i32) {
    %c0_i32 = arith.constant 0 : i32
    %c0_i32_0 = arith.constant 0 : i32
    %c0_i32_1 = arith.constant 0 : i32
    return %c0_i32, %c0_i32_0 : i32, i32
  }
  func.func @transform_2(%arg0: i32) -> i32 {
    %c0_i32 = arith.constant 0 : i32
    %c0_i32_0 = arith.constant 0 : i32
    return %c0_i32 : i32
  }
  func.func @transform_3(%arg0: i32) -> i32 {
    %c0_i32 = arith.constant 0 : i32
    %c0_i32_0 = arith.constant 0 : i32
    return %c0_i32 : i32
  }
  func.func @transform_4(%arg0: i32) -> i32 {
    %c0_i32 = arith.constant 0 : i32
    %c0_i32_0 = arith.constant 0 : i32
    return %c0_i32 : i32
  }
  func.func @transform_5(%arg0: i32) -> (i32, i32) {
    %c0_i32 = arith.constant 0 : i32
    %c0_i32_0 = arith.constant 0 : i32
    return %arg0, %c0_i32 : i32, i32
  }
}

</mosaic_0001>

<llo_original>
// kernel: tpu_custom_call.1
$region0: #{tpu_custom_call.1}
  #allocation0 [shape = 'u32[]', space=smem, size = 0x4, offset = 0x4, fixed_abs, tag = 'smem constant byte address 0x4 - core index']
  #allocation1 [shape = 'u32[144,128]{1,0:T(1,128)}', space=vmem, size = 0x12000, scoped, tag = 'internal scratch']
  #allocation2 [shape = 'f32[1]{0:T(128)S(6)}', space=smem, size = 0x200, scoped, tag = 'scoped memory for tpu_custom_call.1']
  %s0 = inlined_call_operand.hbm [shape: f32[3,8,128], index: 0, kind: input, shape index: {}]
  %s1 = inlined_call_operand.vmem [shape: f32[16,3], index: 1, kind: input, shape index: {}]
  %s2 = inlined_call_operand.vmem [shape: f32[16], index: 2, kind: input, shape index: {}]
  %s3 = inlined_call_operand.vmem [shape: f32[16], index: 3, kind: input, shape index: {}]
  %s4 = inlined_call_operand.<no memory space> [shape: f32[1], index: 4, kind: input, shape index: {}]
  %s5 = inlined_call_operand.hbm [shape: f32[8,128], index: 5, kind: output, shape index: {}]
  %s6 = sld [smem:[#allocation0]]
  $region46: #{tpu_custom_call.1} parent=0
    _
  %s8 = ssub.s32 1, %s6
  %s9 = scalar_select 0, %s8, %s6
  %10 = sst [smem:[#allocation2]] %s4
  $region1: #{tpu_custom_call.1} parent=0
    #allocation3 [shape = 'u8[12288]{0}', space=vmem, size = 0x3000, scoped, tag = 'input window, operand 0, single buffered']
    #allocation4 [shape = 's32[1]{0}', space=sflag, size = 0x4, scoped, tag = 'scoped memory for tpu_custom_call.1']
    #allocation5 [shape = 's32[1]{0}', space=sflag, size = 0x4, scoped, tag = 'scoped memory for tpu_custom_call.1']
    #allocation6 [shape = 's32[1]{0}', space=sflag, size = 0x4, scoped, tag = 'scoped memory for tpu_custom_call.1']
    #allocation7 [shape = 'u8[8192]{0}', space=smem, size = 0x2000, scoped, tag = 'input window, operand 1, single buffered']
    #allocation8 [shape = 'u8[512]{0}', space=smem, size = 0x200, scoped, tag = 'input window, operand 2, single buffered']
    #allocation9 [shape = 's32[1]{0}', space=sflag, size = 0x4, scoped, tag = 'scoped memory for tpu_custom_call.1']
    #allocation10 [shape = 'u8[512]{0}', space=smem, size = 0x200, scoped, tag = 'input window, operand 3, single buffered']
    #allocation11 [shape = 'u8[4096]{0}', space=vmem, size = 0x1000, scoped, tag = 'output window, operand 0, single buffered']
    %11 = vsyncpa [#allocation4], 0
    %12 = vsyncpa [#allocation6], 0
    %13 = vsyncpa [#allocation9], 0
    %14 = vsyncpa [#allocation5], 0
    // Predicated region
    $region2: #{tpu_custom_call.1} parent=1 // pred_check
      _
    $region3: #{tpu_custom_call.1} parent=1 // pred_check_branch
      %16 = sbr.rel (0) target = $region5
    $region4: #{tpu_custom_call.1} parent=1 // pred_region
      %s18 = ssub.s32 384, 384
      %19 = vsyncadd [#allocation4], %s18
      %s20 = sshll.u32 [#allocation3], 4
      %s21 = int_to_ptr.vmem [resolvable:$true] %s20
      %26 = dma.hbm_to_vmem [thread:$0]  %s0, 384, %s21, [#allocation4], 128, 128, 8
    $region5: #{tpu_custom_call.1} parent=1 // pred_fallthru
      _
    // Predicated region
    $region6: #{tpu_custom_call.1} parent=1 // pred_check
      _
    $region7: #{tpu_custom_call.1} parent=1 // pred_check_branch
      %28 = sbr.rel (0) target = $region9
    $region8: #{tpu_custom_call.1} parent=1 // pred_region
      %s30 = ssub.s32 256, 256
      %31 = vsyncadd [#allocation6], %s30
      %s32 = sshll.u32 %s1, 4
      %s33 = int_to_ptr.vmem [resolvable:$true] %s32
      %38 = dma.vmem_to_smem %s33, 256, [#allocation7], [#allocation6], 128, 128, 8
    $region9: #{tpu_custom_call.1} parent=1 // pred_fallthru
      _
    // Predicated region
    $region10: #{tpu_custom_call.1} parent=1 // pred_check
      _
    $region11: #{tpu_custom_call.1} parent=1 // pred_check_branch
      %40 = sbr.rel (0) target = $region13
    $region12: #{tpu_custom_call.1} parent=1 // pred_region
      %s42 = ssub.s32 16, 16
      %43 = vsyncadd [#allocation9], %s42
      %s45 = sshll.u32 %s2, 4
      %s46 = int_to_ptr.vmem [resolvable:$true] %s45
      %48 = dma.vmem_to_smem %s46, 16, [#allocation8], [#allocation9]
    $region13: #{tpu_custom_call.1} parent=1 // pred_fallthru
      _
    // Predicated region
    $region14: #{tpu_custom_call.1} parent=1 // pred_check
      _
    $region15: #{tpu_custom_call.1} parent=1 // pred_check_branch
      %50 = sbr.rel (0) target = $region17
    $region16: #{tpu_custom_call.1} parent=1 // pred_region
      %s52 = ssub.s32 16, 16
      %53 = vsyncadd [#allocation9], %s52
      %s55 = sshll.u32 %s3, 4
      %s56 = int_to_ptr.vmem [resolvable:$true] %s55
      %58 = dma.vmem_to_smem %s56, 16, [#allocation10], [#allocation9]
    $region17: #{tpu_custom_call.1} parent=1 // pred_fallthru
      _
    // Predicated region
    $region18: #{tpu_custom_call.1} parent=1 // pred_check
      _
    $region19: #{tpu_custom_call.1} parent=1 // pred_check_branch
      %60 = sbr.rel (0) target = $region21
    $region20: #{tpu_custom_call.1} parent=1 // pred_region
      _
    $region21: #{tpu_custom_call.1} parent=1 // pred_fallthru
      _
    // Predicated region
    $region22: #{tpu_custom_call.1} parent=1 // pred_check
      _
    $region23: #{tpu_custom_call.1} parent=1 // pred_check_branch
      %62 = sbr.rel (0) target = $region25
    $region24: #{tpu_custom_call.1} parent=1 // pred_region
      %63 = dma.done [#allocation4], 384
    $region25: #{tpu_custom_call.1} parent=1 // pred_fallthru
      _
    // Predicated region
    $region26: #{tpu_custom_call.1} parent=1 // pred_check
      _
    $region27: #{tpu_custom_call.1} parent=1 // pred_check_branch
      %65 = sbr.rel (0) target = $region29
    $region28: #{tpu_custom_call.1} parent=1 // pred_region
      %66 = dma.done [#allocation6], 256
    $region29: #{tpu_custom_call.1} parent=1 // pred_fallthru
      _
    // Predicated region
    $region30: #{tpu_custom_call.1} parent=1 // pred_check
      _
    $region31: #{tpu_custom_call.1} parent=1 // pred_check_branch
      %68 = sbr.rel (0) target = $region33
    $region32: #{tpu_custom_call.1} parent=1 // pred_region
      %69 = dma.done [#allocation9], 16
    $region33: #{tpu_custom_call.1} parent=1 // pred_fallthru
      _
    // Predicated region
    $region34: #{tpu_custom_call.1} parent=1 // pred_check
      _
    $region35: #{tpu_custom_call.1} parent=1 // pred_check_branch
      %71 = sbr.rel (0) target = $region37
    $region36: #{tpu_custom_call.1} parent=1 // pred_region
      %72 = dma.done [#allocation9], 16
    $region37: #{tpu_custom_call.1} parent=1 // pred_fallthru
      _
    %73 = sfence
    %s74 = sld [smem:[#allocation7]]
    %s75 = sld [smem:[#allocation7 + $0x1]]
    %s76 = sld [smem:[#allocation7 + $0x2]]
    %s77 = sld [smem:[#allocation7 + $0x80]]
    %s78 = sld [smem:[#allocation7 + $0x81]]
    %s79 = sld [smem:[#allocation7 + $0x82]]
    %s80 = sld [smem:[#allocation7 + $0x100]]
    %s81 = sld [smem:[#allocation7 + $0x101]]
    %s82 = sld [smem:[#allocation7 + $0x102]]
    %s83 = sld [smem:[#allocation7 + $0x180]]
    %s84 = sld [smem:[#allocation7 + $0x181]]
    %s85 = sld [smem:[#allocation7 + $0x182]]
    %s86 = sld [smem:[#allocation7 + $0x200]]
    %s87 = sld [smem:[#allocation7 + $0x201]]
    %s88 = sld [smem:[#allocation7 + $0x202]]
    %s89 = sld [smem:[#allocation7 + $0x280]]
    %s90 = sld [smem:[#allocation7 + $0x281]]
    %s91 = sld [smem:[#allocation7 + $0x282]]
    %s92 = sld [smem:[#allocation7 + $0x300]]
    %s93 = sld [smem:[#allocation7 + $0x301]]
    %s94 = sld [smem:[#allocation7 + $0x302]]
    %s95 = sld [smem:[#allocation7 + $0x380]]
    %s96 = sld [smem:[#allocation7 + $0x381]]
    %s97 = sld [smem:[#allocation7 + $0x382]]
    %s98 = sld [smem:[#allocation7 + $0x400]]
    %s99 = sld [smem:[#allocation7 + $0x401]]
    %s100 = sld [smem:[#allocation7 + $0x402]]
    %s101 = sld [smem:[#allocation7 + $0x480]]
    %s102 = sld [smem:[#allocation7 + $0x481]]
    %s103 = sld [smem:[#allocation7 + $0x482]]
    %s104 = sld [smem:[#allocation7 + $0x500]]
    %s105 = sld [smem:[#allocation7 + $0x501]]
    %s106 = sld [smem:[#allocation7 + $0x502]]
    %s107 = sld [smem:[#allocation7 + $0x580]]
    %s108 = sld [smem:[#allocation7 + $0x581]]
    %s109 = sld [smem:[#allocation7 + $0x582]]
    %s110 = sld [smem:[#allocation7 + $0x600]]
    %s111 = sld [smem:[#allocation7 + $0x601]]
    %s112 = sld [smem:[#allocation7 + $0x602]]
    %s113 = sld [smem:[#allocation7 + $0x680]]
    %s114 = sld [smem:[#allocation7 + $0x681]]
    %s115 = sld [smem:[#allocation7 + $0x682]]
    %s116 = sld [smem:[#allocation7 + $0x700]]
    %s117 = sld [smem:[#allocation7 + $0x701]]
    %s118 = sld [smem:[#allocation7 + $0x702]]
    %s119 = sld [smem:[#allocation7 + $0x780]]
    %s120 = sld [smem:[#allocation7 + $0x781]]
    %s121 = sld [smem:[#allocation7 + $0x782]]
    %s122 = sld [smem:[#allocation8]]
    %s123 = sld [smem:[#allocation8 + $0x1]]
    %s124 = sld [smem:[#allocation8 + $0x2]]
    %s125 = sld [smem:[#allocation8 + $0x3]]
    %s126 = sld [smem:[#allocation8 + $0x4]]
    %s127 = sld [smem:[#allocation8 + $0x5]]
    %s128 = sld [smem:[#allocation8 + $0x6]]
    %s129 = sld [smem:[#allocation8 + $0x7]]
    %s130 = sld [smem:[#allocation8 + $0x8]]
    %s131 = sld [smem:[#allocation8 + $0x9]]
    %s132 = sld [smem:[#allocation8 + $0xa]]
    %s133 = sld [smem:[#allocation8 + $0xb]]
    %s134 = sld [smem:[#allocation8 + $0xc]]
    %s135 = sld [smem:[#allocation8 + $0xd]]
    %s136 = sld [smem:[#allocation8 + $0xe]]
    %s137 = sld [smem:[#allocation8 + $0xf]]
    %s138 = sld [smem:[#allocation10]]
    %s139 = sld [smem:[#allocation10 + $0x1]]
    %s140 = sld [smem:[#allocation10 + $0x2]]
    %s141 = sld [smem:[#allocation10 + $0x3]]
    %s142 = sld [smem:[#allocation10 + $0x4]]
    %s143 = sld [smem:[#allocation10 + $0x5]]
    %s144 = sld [smem:[#allocation10 + $0x6]]
    %s145 = sld [smem:[#allocation10 + $0x7]]
    %s146 = sld [smem:[#allocation10 + $0x8]]
    %s147 = sld [smem:[#allocation10 + $0x9]]
    %s148 = sld [smem:[#allocation10 + $0xa]]
    %s149 = sld [smem:[#allocation10 + $0xb]]
    %s150 = sld [smem:[#allocation10 + $0xc]]
    %s151 = sld [smem:[#allocation10 + $0xd]]
    %s152 = sld [smem:[#allocation10 + $0xe]]
    %s153 = sld [smem:[#allocation10 + $0xf]]
    %s154 = sld [smem:[#allocation2]]
    %v155 = vld [vmem:[#allocation3] sm:$0xff]
    %v156 = vld [vmem:[#allocation3 + $0x8] sm:$0xff]
    %v157 = vld [vmem:[#allocation3 + $0x10] sm:$0xff]
    %v158 = vstv %s74
    %v159 = vmul.f32 %v158, %v155
    %v160 = vstv %s122
    %v161 = vadd.f32 %v160, %v159
    %v162 = vstv %s75
    %v163 = vmul.f32 %v162, %v156
    %v164 = vadd.f32 %v161, %v163
    %v165 = vstv %s76
    %v166 = vmul.f32 %v165, %v157
    %v167 = vadd.f32 %v164, %v166
    %v168 = vmax.f32 %v167, 0.0
    %v169 = vstv %s138
    %v170 = vmul.f32 %v168, %v169
    %v171 = vadd.f32 %v170, 0.0
    %v172 = vstv %s77
    %v173 = vmul.f32 %v172, %v155
    %v174 = vstv %s123
    %v175 = vadd.f32 %v174, %v173
    %v176 = vstv %s78
    %v177 = vmul.f32 %v176, %v156
    %v178 = vadd.f32 %v175, %v177
    %v179 = vstv %s79
    %v180 = vmul.f32 %v179, %v157
    %v181 = vadd.f32 %v178, %v180
    %v182 = vmax.f32 %v181, 0.0
    %v183 = vstv %s139
    %v184 = vmul.f32 %v182, %v183
    %v185 = vadd.f32 %v171, %v184
    %v186 = vstv %s80
    %v187 = vmul.f32 %v186, %v155
    %v188 = vstv %s124
    %v189 = vadd.f32 %v188, %v187
    %v190 = vstv %s81
    %v191 = vmul.f32 %v190, %v156
    %v192 = vadd.f32 %v189, %v191
    %v193 = vstv %s82
    %v194 = vmul.f32 %v193, %v157
    %v195 = vadd.f32 %v192, %v194
    %v196 = vmax.f32 %v195, 0.0
    %v197 = vstv %s140
    %v198 = vmul.f32 %v196, %v197
    %v199 = vadd.f32 %v185, %v198
    %v200 = vstv %s83
    %v201 = vmul.f32 %v200, %v155
    %v202 = vstv %s125
    %v203 = vadd.f32 %v202, %v201
    %v204 = vstv %s84
    %v205 = vmul.f32 %v204, %v156
    %v206 = vadd.f32 %v203, %v205
    %v207 = vstv %s85
    %v208 = vmul.f32 %v207, %v157
    %v209 = vadd.f32 %v206, %v208
    %v210 = vmax.f32 %v209, 0.0
    %v211 = vstv %s141
    %v212 = vmul.f32 %v210, %v211
    %v213 = vadd.f32 %v199, %v212
    %v214 = vstv %s86
    %v215 = vmul.f32 %v214, %v155
    %v216 = vstv %s126
    %v217 = vadd.f32 %v216, %v215
    %v218 = vstv %s87
    %v219 = vmul.f32 %v218, %v156
    %v220 = vadd.f32 %v217, %v219
    %v221 = vstv %s88
    %v222 = vmul.f32 %v221, %v157
    %v223 = vadd.f32 %v220, %v222
    %v224 = vmax.f32 %v223, 0.0
    %v225 = vstv %s142
    %v226 = vmul.f32 %v224, %v225
    %v227 = vadd.f32 %v213, %v226
    %v228 = vstv %s89
    %v229 = vmul.f32 %v228, %v155
    %v230 = vstv %s127
    %v231 = vadd.f32 %v230, %v229
    %v232 = vstv %s90
    %v233 = vmul.f32 %v232, %v156
    %v234 = vadd.f32 %v231, %v233
    %v235 = vstv %s91
    %v236 = vmul.f32 %v235, %v157
    %v237 = vadd.f32 %v234, %v236
    %v238 = vmax.f32 %v237, 0.0
    %v239 = vstv %s143
    %v240 = vmul.f32 %v238, %v239
    %v241 = vadd.f32 %v227, %v240
    %v242 = vstv %s92
    %v243 = vmul.f32 %v242, %v155
    %v244 = vstv %s128
    %v245 = vadd.f32 %v244, %v243
    %v246 = vstv %s93
    %v247 = vmul.f32 %v246, %v156
    %v248 = vadd.f32 %v245, %v247
    %v249 = vstv %s94
    %v250 = vmul.f32 %v249, %v157
    %v251 = vadd.f32 %v248, %v250
    %v252 = vmax.f32 %v251, 0.0
    %v253 = vstv %s144
    %v254 = vmul.f32 %v252, %v253
    %v255 = vadd.f32 %v241, %v254
    %v256 = vstv %s95
    %v257 = vmul.f32 %v256, %v155
    %v258 = vstv %s129
    %v259 = vadd.f32 %v258, %v257
    %v260 = vstv %s96
    %v261 = vmul.f32 %v260, %v156
    %v262 = vadd.f32 %v259, %v261
    %v263 = vstv %s97
    %v264 = vmul.f32 %v263, %v157
    %v265 = vadd.f32 %v262, %v264
    %v266 = vmax.f32 %v265, 0.0
    %v267 = vstv %s145
    %v268 = vmul.f32 %v266, %v267
    %v269 = vadd.f32 %v255, %v268
    %v270 = vstv %s98
    %v271 = vmul.f32 %v270, %v155
    %v272 = vstv %s130
    %v273 = vadd.f32 %v272, %v271
    %v274 = vstv %s99
    %v275 = vmul.f32 %v274, %v156
    %v276 = vadd.f32 %v273, %v275
    %v277 = vstv %s100
    %v278 = vmul.f32 %v277, %v157
    %v279 = vadd.f32 %v276, %v278
    %v280 = vmax.f32 %v279, 0.0
    %v281 = vstv %s146
    %v282 = vmul.f32 %v280, %v281
    %v283 = vadd.f32 %v269, %v282
    %v284 = vstv %s101
    %v285 = vmul.f32 %v284, %v155
    %v286 = vstv %s131
    %v287 = vadd.f32 %v286, %v285
    %v288 = vstv %s102
    %v289 = vmul.f32 %v288, %v156
    %v290 = vadd.f32 %v287, %v289
    %v291 = vstv %s103
    %v292 = vmul.f32 %v291, %v157
    %v293 = vadd.f32 %v290, %v292
    %v294 = vmax.f32 %v293, 0.0
    %v295 = vstv %s147
    %v296 = vmul.f32 %v294, %v295
    %v297 = vadd.f32 %v283, %v296
    %v298 = vstv %s104
    %v299 = vmul.f32 %v298, %v155
    %v300 = vstv %s132
    %v301 = vadd.f32 %v300, %v299
    %v302 = vstv %s105
    %v303 = vmul.f32 %v302, %v156
    %v304 = vadd.f32 %v301, %v303
    %v305 = vstv %s106
    %v306 = vmul.f32 %v305, %v157
    %v307 = vadd.f32 %v304, %v306
    %v308 = vmax.f32 %v307, 0.0
    %v309 = vstv %s148
    %v310 = vmul.f32 %v308, %v309
    %v311 = vadd.f32 %v297, %v310
    %v312 = vstv %s107
    %v313 = vmul.f32 %v312, %v155
    %v314 = vstv %s133
    %v315 = vadd.f32 %v314, %v313
    %v316 = vstv %s108
    %v317 = vmul.f32 %v316, %v156
    %v318 = vadd.f32 %v315, %v317
    %v319 = vstv %s109
    %v320 = vmul.f32 %v319, %v157
    %v321 = vadd.f32 %v318, %v320
    %v322 = vmax.f32 %v321, 0.0
    %v323 = vstv %s149
    %v324 = vmul.f32 %v322, %v323
    %v325 = vadd.f32 %v311, %v324
    %v326 = vstv %s110
    %v327 = vmul.f32 %v326, %v155
    %v328 = vstv %s134
    %v329 = vadd.f32 %v328, %v327
    %v330 = vstv %s111
    %v331 = vmul.f32 %v330, %v156
    %v332 = vadd.f32 %v329, %v331
    %v333 = vstv %s112
    %v334 = vmul.f32 %v333, %v157
    %v335 = vadd.f32 %v332, %v334
    %v336 = vmax.f32 %v335, 0.0
    %v337 = vstv %s150
    %v338 = vmul.f32 %v336, %v337
    %v339 = vadd.f32 %v325, %v338
    %v340 = vstv %s113
    %v341 = vmul.f32 %v340, %v155
    %v342 = vstv %s135
    %v343 = vadd.f32 %v342, %v341
    %v344 = vstv %s114
    %v345 = vmul.f32 %v344, %v156
    %v346 = vadd.f32 %v343, %v345
    %v347 = vstv %s115
    %v348 = vmul.f32 %v347, %v157
    %v349 = vadd.f32 %v346, %v348
    %v350 = vmax.f32 %v349, 0.0
    %v351 = vstv %s151
    %v352 = vmul.f32 %v350, %v351
    %v353 = vadd.f32 %v339, %v352
    %v354 = vstv %s116
    %v355 = vmul.f32 %v354, %v155
    %v356 = vstv %s136
    %v357 = vadd.f32 %v356, %v355
    %v358 = vstv %s117
    %v359 = vmul.f32 %v358, %v156
    %v360 = vadd.f32 %v357, %v359
    %v361 = vstv %s118
    %v362 = vmul.f32 %v361, %v157
    %v363 = vadd.f32 %v360, %v362
    %v364 = vmax.f32 %v363, 0.0
    %v365 = vstv %s152
    %v366 = vmul.f32 %v364, %v365
    %v367 = vadd.f32 %v353, %v366
    %v368 = vstv %s119
    %v369 = vmul.f32 %v368, %v155
    %v370 = vstv %s137
    %v371 = vadd.f32 %v370, %v369
    %v372 = vstv %s120
    %v373 = vmul.f32 %v372, %v156
    %v374 = vadd.f32 %v371, %v373
    %v375 = vstv %s121
    %v376 = vmul.f32 %v375, %v157
    %v377 = vadd.f32 %v374, %v376
    %v378 = vmax.f32 %v377, 0.0
    %v379 = vstv %s153
    %v380 = vmul.f32 %v378, %v379
    %v381 = vadd.f32 %v367, %v380
    %v382 = vstv %s154
    %v383 = vadd.f32 %v381, %v382
    %384 = vst [vmem:[#allocation11] sm:$0xff] %v383
    // Predicated region
    $region38: #{tpu_custom_call.1} parent=1 // pred_check
      _
    $region39: #{tpu_custom_call.1} parent=1 // pred_check_branch
      %386 = sbr.rel (0) target = $region41
    $region40: #{tpu_custom_call.1} parent=1 // pred_region
      %s388 = ssub.s32 128, 128
      %389 = vsyncadd [#allocation5], %s388
      %s391 = sshll.u32 [#allocation11], 4
      %s392 = int_to_ptr.vmem [resolvable:$true] %s391
      %394 = dma.vmem_to_hbm [thread:$0]  %s392, 128, %s5, [#allocation5]
    $region41: #{tpu_custom_call.1} parent=1 // pred_fallthru
      _
    // Predicated region
    $region42: #{tpu_custom_call.1} parent=1 // pred_check
      _
    $region43: #{tpu_custom_call.1} parent=1 // pred_check_branch
      %396 = sbr.rel (0) target = $region45
    $region44: #{tpu_custom_call.1} parent=1 // pred_region
      %397 = dma.done [#allocation5], 128
    $region45: #{tpu_custom_call.1} parent=1 // pred_fallthru
      _
    %398 = vsyncpa [#allocation4], 1
    %399 = vsyncpa [#allocation5], 1
    %400 = vsyncpa [#allocation6], 1
    %401 = vsyncpa [#allocation9], 1

</llo_original>
